<compile_context>
chip_gen: v5e
topology: v5e:2x2
jax: 0.10.0
libtpu: 0.0.40
codegen_flags: <defaults>
</compile_context>

<pallas_src>
import functools
import math

import jax
import jax.numpy as jnp
from jax.experimental import pallas as pl
from jax.experimental.pallas import tpu as pltpu


# Scoped-VMEM sizing: request 32 MiB explicitly (>= the scoped default on every
# generation: 16 MiB v5e, 32 MiB v6e/v7x; well under physical VMEM everywhere)
# and size tiles against ~70% of it so Mosaic internal scratch / semaphores
# never push the kernel over the limit at compile time.
_VMEM_LIMIT_BYTES = 32 * 1024 * 1024
_VMEM_BUDGET_BYTES = int(0.7 * _VMEM_LIMIT_BYTES)
_MAX_ROW_TILE = 1024          # 512-1024-row tiles already hit ~85-86% of HBM BW
_MAX_LANE_ELEMS = 32 * 1024   # cap on flattened lane width (elements per row)


def make_positional_encoding(d_model: int, max_seq_length: int = 5000,
                             dtype=jnp.float32) -> jnp.ndarray:
    """Deterministic buffer init, matching PositionalEncoding.__init__.

    Pass the model dtype here so the forward path never has to cast pe.
    """
    if not isinstance(d_model, int) or d_model <= 0:
        raise ValueError("d_model must be a positive integer")
    if not isinstance(max_seq_length, int) or max_seq_length <= 0:
        raise ValueError("max_seq_length must be a positive integer")
    position = jnp.arange(max_seq_length, dtype=jnp.float32)[:, None]            # (S, 1)
    div_term = jnp.exp(
        jnp.arange(0, d_model, 2, dtype=jnp.float32) * (-math.log(10000.0) / d_model)
    )                                                                             # (D/2,)
    pe = jnp.zeros((max_seq_length, d_model), dtype=jnp.float32)
    pe = pe.at[:, 0::2].set(jnp.sin(position * div_term))
    pe = pe.at[:, 1::2].set(jnp.cos(position * div_term))
    # torch: pe.unsqueeze(0).transpose(0, 1) -> (max_seq_length, 1, d_model)
    return pe[:, None, :].astype(dtype)


def _round_up(v: int, m: int) -> int:
    return ((v + m - 1) // m) * m


def _pick_row_tile(rows: int, per_row_bytes: int) -> int:
    """Row tile: multiple of 8, fits the VMEM budget, keeps the grid multi-step."""
    if rows <= 8:
        return rows  # block dim equal to the full array dim satisfies tiling rules
    ts = _VMEM_BUDGET_BYTES // max(per_row_bytes, 1)
    ts = min(ts, _MAX_ROW_TILE)
    if rows >= 64:
        # >=4 grid steps so v7x's two TensorCores both get work and the DMA
        # pipeline has something to overlap (per-step overhead is only ~0.35 us).
        ts = min(ts, _round_up(pl.cdiv(rows, 4), 8))
    ts = min(ts, _round_up(rows, 8))
    return max(8, (ts // 8) * 8)


def _choose_slab_shape(rows: int, cols: int) -> tuple[int, int]:
    """Lane-dense 2-D view (R, L) of a contiguous (rows, cols) buffer."""
    if cols % 128 == 0:
        return rows, cols
    total = rows * cols
    if total % 128 == 0:
        k = min(total, _MAX_LANE_ELEMS) // 128
        while k >= 1:
            lane = k * 128
            if total % lane == 0:
                return total // lane, lane
            k -= 1
    return rows, cols  # cannot make lane-dense; masked stores but still correct


# ----------------------------- kernels ---------------------------------------

def _add_kernel(x_ref, pe_ref, o_ref):
    # Plain streaming add: both tiles have identical (rt, lt) shape.
    o_ref[...] = x_ref[...] + pe_ref[...]


def _batch_bcast_kernel(x_ref, pe_ref, o_ref, *, nb: int, d: int):
    # x_ref/o_ref: (ts, nb*d); pe_ref: (ts, d); d % 128 == 0 so every per-batch
    # column slice is lane-aligned -> unmasked stores, no concat temp in VMEM.
    pe = pe_ref[...]
    for b in range(nb):
        o_ref[:, b * d:(b + 1) * d] = x_ref[:, b * d:(b + 1) * d] + pe


def _concat_bcast_kernel(x_ref, pe_ref, o_ref, *, nb: int):
    # Output lanes (nb*d) are 128-aligned but d is not: per-batch slices would be
    # lane-misaligned, so broadcast pe across the batch with an in-register concat.
    o_ref[...] = x_ref[...] + jnp.concatenate([pe_ref[...]] * nb, axis=-1)


# ------------------------- pallas_call wrappers -------------------------------

def _elementwise_add_2d(x2d, pe2d, donate_x: bool):
    """x2d and pe2d have identical (R, L) shape; tile rows and (if huge) lanes."""
    R, L = x2d.shape
    itemsize = jnp.dtype(x2d.dtype).itemsize
    if L % 128 == 0:
        lt = max(128, (min(L, _MAX_LANE_ELEMS) // 128) * 128)
    else:
        lt = L  # non-lane-dense fallback (rare): masked stores but correct
    per_row = 2 * 3 * lt * itemsize  # (x in + pe in + out) double-buffered
    rt = _pick_row_tile(R, per_row)
    grid = (pl.cdiv(R, rt), pl.cdiv(L, lt))
    return pl.pallas_call(
        _add_kernel,
        out_shape=jax.ShapeDtypeStruct((R, L), x2d.dtype),
        grid=grid,
        in_specs=[pl.BlockSpec((rt, lt), lambda i, j: (i, j)),
                  pl.BlockSpec((rt, lt), lambda i, j: (i, j))],
        out_specs=pl.BlockSpec((rt, lt), lambda i, j: (i, j)),
        input_output_aliases=({0: 0} if donate_x else {}),
        compiler_params=pltpu.CompilerParams(
            dimension_semantics=("parallel", "parallel"),
            vmem_limit_bytes=_VMEM_LIMIT_BYTES),
    )(x2d, pe2d)


def _batched_broadcast_add(x2d, pe2d, batch: int, d: int, donate_x: bool):
    """x2d: (S, batch*d) lane-dense; pe2d: (S, d); requires d % 128 == 0."""
    S = x2d.shape[0]
    itemsize = jnp.dtype(x2d.dtype).itemsize

    def per_row(bc):  # x in + out (bc*d each) + pe (d), all double-buffered
        return 2 * (2 * bc * d + d) * itemsize

    # Lane-axis (batch) chunking fallback so an 8-row tile always fits VMEM.
    bc = batch
    while bc > 1 and 8 * per_row(bc) > _VMEM_BUDGET_BYTES:
        bc = (bc + 1) // 2

    ts = _pick_row_tile(S, per_row(bc))
    grid = (pl.cdiv(S, ts), pl.cdiv(batch, bc))
    return pl.pallas_call(
        functools.partial(_batch_bcast_kernel, nb=bc, d=d),
        out_shape=jax.ShapeDtypeStruct(x2d.shape, x2d.dtype),
        grid=grid,
        in_specs=[pl.BlockSpec((ts, bc * d), lambda i, j: (i, j)),   # x tile
                  pl.BlockSpec((ts, d), lambda i, j: (i, 0))],       # pe: 1/bc of x traffic
        out_specs=pl.BlockSpec((ts, bc * d), lambda i, j: (i, j)),
        input_output_aliases=({0: 0} if donate_x else {}),
        compiler_params=pltpu.CompilerParams(
            dimension_semantics=("parallel", "parallel"),
            vmem_limit_bytes=_VMEM_LIMIT_BYTES),
    )(x2d, pe2d)


def _concat_broadcast_add(x2d, pe2d, batch: int, d: int, donate_x: bool):
    """x2d: (S, batch*d) with batch*d % 128 == 0 but d % 128 != 0."""
    S = x2d.shape[0]
    itemsize = jnp.dtype(x2d.dtype).itemsize
    # x in + out + pe double-buffered, plus the concat temp (one x-tile's worth).
    per_row = 2 * (2 * batch * d + d) * itemsize + batch * d * itemsize
    ts = _pick_row_tile(S, per_row)
    grid = (pl.cdiv(S, ts),)
    return pl.pallas_call(
        functools.partial(_concat_bcast_kernel, nb=batch),
        out_shape=jax.ShapeDtypeStruct(x2d.shape, x2d.dtype),
        grid=grid,
        in_specs=[pl.BlockSpec((ts, batch * d), lambda i: (i, 0)),
                  pl.BlockSpec((ts, d), lambda i: (i, 0))],
        out_specs=pl.BlockSpec((ts, batch * d), lambda i: (i, 0)),
        input_output_aliases=({0: 0} if donate_x else {}),
        compiler_params=pltpu.CompilerParams(
            dimension_semantics=("parallel",),
            vmem_limit_bytes=_VMEM_LIMIT_BYTES),
    )(x2d, pe2d)


def positional_encoding_forward(x: jnp.ndarray, pe: jnp.ndarray,
                                *, donate_x: bool = False) -> jnp.ndarray:
    """x: (seq_len, batch, d_model); pe: (max_seq_length, 1, d_model) or (max_seq_length, d_model).

    donate_x: set True only when the caller actually donates x (e.g. via
    jit donate_argnums); otherwise XLA inserts a defensive copy (a full extra
    HBM pass) that erases the aliasing win.
    """
    S, B, D = x.shape
    if pe.shape[-1] != D:
        raise ValueError(f"Input last dim ({D}) must equal d_model ({pe.shape[-1]})")
    if S > pe.shape[0]:
        raise ValueError(f"Sequence length ({S}) exceeds max_seq_length ({pe.shape[0]})")

    # Slice first, cast second: only the S rows actually used ever touch HBM,
    # never the full (max_seq_length, D) buffer.  Build the buffer in the model
    # dtype (make_positional_encoding(dtype=...)) to make the cast a no-op.
    pe2d = pe.reshape(pe.shape[0], D)[:S]
    if pe2d.dtype != x.dtype:
        # TODO(synk): for low-precision x this adds in x.dtype rather than the
        # promoted dtype PyTorch's `x + pe` (f32 buffer) would use.
        pe2d = pe2d.astype(x.dtype)

    if B == 1:
        # No batch broadcast at all: plain streaming add; flatten to a lane-dense
        # slab if D is not a multiple of 128 (free contiguous reshape).
        R, L = _choose_slab_shape(S, D)
        out = _elementwise_add_2d(x.reshape(R, L), pe2d.reshape(R, L), donate_x)
    elif D % 128 == 0:
        # Lane-aligned per-batch slice add; pe HBM traffic is 1/B of x.
        out = _batched_broadcast_add(x.reshape(S, B * D), pe2d, B, D, donate_x)
    elif (B * D) % 128 == 0:
        # Output lanes aligned but per-batch slices are not: in-register concat
        # broadcast; pe HBM traffic still 1/B of x.
        out = _concat_broadcast_add(x.reshape(S, B * D), pe2d, B, D, donate_x)
    else:
        # Tiny / odd B*D: masked partial stores would dominate, so pre-broadcast
        # pe in HBM (negligible extra traffic at these sizes) and stream a
        # flattened lane-dense slab with unmasked stores.
        pe_full = jnp.broadcast_to(pe2d[:, None, :], (S, B, D))
        R, L = _choose_slab_shape(S * B, D)
        out = _elementwise_add_2d(x.reshape(R, L), pe_full.reshape(R, L), donate_x)

    return out.reshape(S, B, D)


if __name__ == "__main__":
    d_model = 32
    max_seq_length = 64
    seq_len = 8
    batch = 2

    key = jax.random.PRNGKey(0)
    x = jax.random.normal(key, (seq_len, batch, d_model), dtype=jnp.float32)
    pe = make_positional_encoding(d_model, max_seq_length)

    out = positional_encoding_forward(x, pe)
    out = jax.block_until_ready(out)

    # Pure-JAX reference of the same forward semantics.
    ref = x + pe[:seq_len]
    assert out.shape == (seq_len, batch, d_model)
    assert jnp.allclose(out, ref, atol=1e-6, rtol=1e-6)

    # Exercise the lane-aligned batch-broadcast path (D % 128 == 0) ...
    x2 = jax.random.normal(jax.random.PRNGKey(1), (16, 2, 128), dtype=jnp.float32)
    pe2 = make_positional_encoding(128, max_seq_length)
    out2 = jax.block_until_ready(positional_encoding_forward(x2, pe2))
    assert jnp.allclose(out2, x2 + pe2[:16], atol=1e-6, rtol=1e-6)

    # ... and the in-register concat path (B*D % 128 == 0, D % 128 != 0).
    x3 = jax.random.normal(jax.random.PRNGKey(2), (8, 4, 32), dtype=jnp.float32)
    out3 = jax.block_until_ready(positional_encoding_forward(x3, pe))
    assert jnp.allclose(out3, x3 + pe[:8], atol=1e-6, rtol=1e-6)

    print("KERNEL_OK")
</pallas_src>

<mosaic_0001>
module attributes {stable_mosaic.version = 11 : i64} {
  func.func @_add_kernel(%arg0: i32, %arg1: i32, %arg2: memref<1x512xf32, #tpu.memory_space<vmem>>, %arg3: memref<1x512xf32, #tpu.memory_space<vmem>>, %arg4: memref<1x512xf32, #tpu.memory_space<vmem>>) attributes {dimension_semantics = [#tpu.dimension_semantics<parallel>, #tpu.dimension_semantics<parallel>], iteration_bounds = array<i64: 1, 1>, scalar_prefetch = 0 : i64, scratch_operands = 0 : i64, tpu.core_type = #tpu.core_type<tc>, window_params = [{transform_indices = @transform_0, window_bounds = array<i64: 1, 512>}, {transform_indices = @transform_1, window_bounds = array<i64: 1, 512>}, {transform_indices = @transform_2, window_bounds = array<i64: 1, 512>}]} {
    %c0 = arith.constant 0 : index
    %c0_0 = arith.constant 0 : index
    %0 = vector.load %arg2[%c0, %c0_0] : memref<1x512xf32, #tpu.memory_space<vmem>>, vector<1x512xf32>
    %c0_1 = arith.constant 0 : index
    %c0_2 = arith.constant 0 : index
    %1 = vector.load %arg3[%c0_1, %c0_2] : memref<1x512xf32, #tpu.memory_space<vmem>>, vector<1x512xf32>
    %2 = arith.addf %0, %1 : vector<1x512xf32>
    %c0_3 = arith.constant 0 : index
    %c0_4 = arith.constant 0 : index
    %3 = vector.load %arg4[%c0_3, %c0_4] : memref<1x512xf32, #tpu.memory_space<vmem>>, vector<1x512xf32>
    tpu.vector_store %arg4[%c0_3, %c0_4], %2 {strides = array<i32>} : memref<1x512xf32, #tpu.memory_space<vmem>>, vector<1x512xf32>,
    return
  }
  func.func @transform_0(%arg0: i32, %arg1: i32) -> (i32, i32) {
    %c0_i32 = arith.constant 0 : i32
    return %arg0, %arg1 : i32, i32
  }
  func.func @transform_1(%arg0: i32, %arg1: i32) -> (i32, i32) {
    %c0_i32 = arith.constant 0 : i32
    return %arg0, %arg1 : i32, i32
  }
  func.func @transform_2(%arg0: i32, %arg1: i32) -> (i32, i32) {
    %c0_i32 = arith.constant 0 : i32
    return %arg0, %arg1 : i32, i32
  }
}

</mosaic_0001>

<llo_original>
// kernel: tpu_custom_call.1
$region0: #{tpu_custom_call.1}
  #allocation0 [shape = 'u32[]', space=smem, size = 0x4, offset = 0x4, fixed_abs, tag = 'smem constant byte address 0x4 - core index']
  #allocation1 [shape = 'u32[72,128]{1,0:T(1,128)}', space=vmem, size = 0x9000, scoped, tag = 'internal scratch']
  %s0 = inlined_call_operand.hbm [shape: f32[1,512], index: 0, kind: input, shape index: {}]
  %s1 = inlined_call_operand.hbm [shape: f32[1,512], index: 1, kind: input, shape index: {}]
  %s2 = inlined_call_operand.hbm [shape: f32[1,512], index: 2, kind: output, shape index: {}]
  %s3 = sld [smem:[#allocation0]]
  $region26: #{tpu_custom_call.1} parent=0
    _
  %s5 = ssub.s32 1, %s3
  %s6 = scalar_select 0, %s5, %s3
  $region1: #{tpu_custom_call.1} parent=0
    #allocation2 [shape = 'u8[2048]{0}', space=vmem, size = 0x800, scoped, tag = 'input window, operand 0, single buffered']
    #allocation3 [shape = 's32[1]{0}', space=sflag, size = 0x4, scoped, tag = 'scoped memory for tpu_custom_call.1']
    #allocation4 [shape = 's32[1]{0}', space=sflag, size = 0x4, scoped, tag = 'scoped memory for tpu_custom_call.1']
    #allocation5 [shape = 'u8[2048]{0}', space=vmem, size = 0x800, scoped, tag = 'input window, operand 1, single buffered']
    #allocation6 [shape = 's32[1]{0}', space=sflag, size = 0x4, scoped, tag = 'scoped memory for tpu_custom_call.1']
    #allocation7 [shape = 'u8[2048]{0}', space=vmem, size = 0x800, scoped, tag = 'output window, operand 0, single buffered']
    %7 = vsyncpa [#allocation3], 0
    %8 = vsyncpa [#allocation6], 0
    %9 = vsyncpa [#allocation4], 0
    // Predicated region
    $region2: #{tpu_custom_call.1} parent=1 // pred_check
      _
    $region3: #{tpu_custom_call.1} parent=1 // pred_check_branch
      %11 = sbr.rel (0) target = $region5
    $region4: #{tpu_custom_call.1} parent=1 // pred_region
      %13 = vsyncadd [#allocation3], 0
      %s15 = sshll.u32 %s0, 4
      %s16 = int_to_ptr.hbm [resolvable:$true] %s15
      %s17 = sshll.u32 [#allocation2], 4
      %s18 = int_to_ptr.vmem [resolvable:$true] %s17
      %20 = dma.hbm_to_vmem [thread:$0]  %s16, 64, %s18, [#allocation3]
    $region5: #{tpu_custom_call.1} parent=1 // pred_fallthru
      _
    // Predicated region
    $region6: #{tpu_custom_call.1} parent=1 // pred_check
      _
    $region7: #{tpu_custom_call.1} parent=1 // pred_check_branch
      %22 = sbr.rel (0) target = $region9
    $region8: #{tpu_custom_call.1} parent=1 // pred_region
      %24 = vsyncadd [#allocation6], 0
      %s26 = sshll.u32 %s1, 4
      %s27 = int_to_ptr.hbm [resolvable:$true] %s26
      %s28 = sshll.u32 [#allocation5], 4
      %s29 = int_to_ptr.vmem [resolvable:$true] %s28
      %31 = dma.hbm_to_vmem [thread:$0]  %s27, 64, %s29, [#allocation6]
    $region9: #{tpu_custom_call.1} parent=1 // pred_fallthru
      _
    // Predicated region
    $region10: #{tpu_custom_call.1} parent=1 // pred_check
      _
    $region11: #{tpu_custom_call.1} parent=1 // pred_check_branch
      %33 = sbr.rel (0) target = $region13
    $region12: #{tpu_custom_call.1} parent=1 // pred_region
      %35 = dma.done [#allocation3], 64
    $region13: #{tpu_custom_call.1} parent=1 // pred_fallthru
      _
    // Predicated region
    $region14: #{tpu_custom_call.1} parent=1 // pred_check
      _
    $region15: #{tpu_custom_call.1} parent=1 // pred_check_branch
      %37 = sbr.rel (0) target = $region17
    $region16: #{tpu_custom_call.1} parent=1 // pred_region
      %39 = dma.done [#allocation6], 64
    $region17: #{tpu_custom_call.1} parent=1 // pred_fallthru
      _
    %v40 = vld [vmem:[#allocation2] sm:$0xf]
    %v41 = vld [vmem:[#allocation5] sm:$0xf]
    %v42 = vadd.f32 %v40, %v41
    %v43 = vlaneseq
    %vm44 = vcmp.ge.s32.totalorder %v43, 0
    %vm45 = vcmp.lt.s32.totalorder %v43, 512
    %vm46 = vmand %vm44, %vm45
    %47 = vst.msk [vmem:[#allocation7] sm:$0xf] %vm46, %v42
    // Predicated region
    $region18: #{tpu_custom_call.1} parent=1 // pred_check
      _
    $region19: #{tpu_custom_call.1} parent=1 // pred_check_branch
      %49 = sbr.rel (0) target = $region21
    $region20: #{tpu_custom_call.1} parent=1 // pred_region
      %51 = vsyncadd [#allocation4], 0
      %s53 = sshll.u32 [#allocation7], 4
      %s54 = int_to_ptr.vmem [resolvable:$true] %s53
      %s55 = sshll.u32 %s2, 4
      %s56 = int_to_ptr.hbm [resolvable:$true] %s55
      %58 = dma.vmem_to_hbm [thread:$0]  %s54, 64, %s56, [#allocation4]
    $region21: #{tpu_custom_call.1} parent=1 // pred_fallthru
      _
    // Predicated region
    $region22: #{tpu_custom_call.1} parent=1 // pred_check
      _
    $region23: #{tpu_custom_call.1} parent=1 // pred_check_branch
      %60 = sbr.rel (0) target = $region25
    $region24: #{tpu_custom_call.1} parent=1 // pred_region
      %62 = dma.done [#allocation4], 64
    $region25: #{tpu_custom_call.1} parent=1 // pred_fallthru
      _
    %63 = vsyncpa [#allocation3], 1
    %64 = vsyncpa [#allocation6], 1
    %65 = vsyncpa [#allocation4], 1

</llo_original>
